<compile_context>
chip_gen: v5e
topology: v5e:2x2
jax: 0.10.0
libtpu: 0.0.40
codegen_flags: <defaults>
</compile_context>

<pallas_src>
import math
import functools
import numpy as np

import jax
import jax.numpy as jnp
from jax import lax
from jax.experimental import pallas as pl
from jax.experimental.pallas import tpu as pltpu


# ----------------------------------------------------------------------------- weights

def _as_pair(v, dim, cast):
    if isinstance(v, (int, float)):
        return [cast(v)] * dim
    return [cast(e) for e in v]


def make_gaussian_kernel_2d(kernel_size, sigma):
    """2-D Gaussian kernel, identical math to the PyTorch __init__
    (product of 1-D Gaussians over a meshgrid, then normalized)."""
    ks = _as_pair(kernel_size, 2, int)
    sg = _as_pair(sigma, 2, float)
    grids = np.meshgrid(*[np.arange(s, dtype=np.float64) for s in ks], indexing="ij")
    kernel = np.ones([], dtype=np.float64)
    for size, std, mgrid in zip(ks, sg, grids):
        mean = (size - 1) / 2.0
        kernel = kernel * (1.0 / (std * math.sqrt(2 * math.pi))
                           * np.exp(-(((mgrid - mean) / std) ** 2) / 2.0))
    kernel = kernel / np.sum(kernel)
    return kernel.astype(np.float32)


def make_separable_gaussian(kernel_size, sigma):
    """Same kernel factored into (g0, g1) with outer(g0, g1) == 2-D normalized kernel.
    The PyTorch kernel is an outer product of 1-D Gaussians normalized by the total
    sum, so it is exactly separable. Returned as tuples of Python floats so they fold
    into the kernel as immediates (no SMEM loads, no per-tap broadcasts)."""
    ks = _as_pair(kernel_size, 2, int)
    sg = _as_pair(sigma, 2, float)
    taps = []
    for size, std in zip(ks, sg):
        m = np.arange(size, dtype=np.float64)
        mean = (size - 1) / 2.0
        g = (1.0 / (std * math.sqrt(2 * math.pi))
             * np.exp(-(((m - mean) / std) ** 2) / 2.0))
        g = g / np.sum(g)
        taps.append(tuple(float(v) for v in g))
    return taps[0], taps[1]


# ------------------------------------------------------------------------------ kernel

def _smooth_kernel(x_ref, o_ref, *, g0, g1, H_out, W_out):
    # x_ref: VMEM (B, H, W)          image index (N*C) on the leading, untiled axis
    # o_ref: VMEM (B, H_out, W_out)
    # g0, g1: compile-time Python float taps (H-axis / W-axis 1-D Gaussians)

    # Column pass first (taps shift along H = sublane axis), streamed per-tap straight
    # from the ref so only the (B, H_out, W) intermediate is ever live.
    tmp = g0[0] * x_ref[:, 0:H_out, :].astype(jnp.float32)
    for i in range(1, len(g0)):
        tmp = tmp + g0[i] * x_ref[:, i:i + H_out, :].astype(jnp.float32)

    # Row pass (taps shift along W = lane axis) on the already-H-reduced intermediate,
    # so the lane-shifted operand volume is the minimum possible.
    acc = g1[0] * tmp[:, :, 0:W_out]
    for j in range(1, len(g1)):
        acc = acc + g1[j] * tmp[:, :, j:j + W_out]

    o_ref[...] = acc.astype(o_ref.dtype)


# ----------------------------------------------------------------------------- wrapper

def _choose_nc_block(NC, plane_bytes, target_block_bytes):
    """Pick the number of (n, c) planes per block: ~target_block_bytes per input block,
    >=2 grid steps (v7x megacore), >=4 steps if blocks stay >=1 MiB, and B | NC so there
    is no padding and no partially-masked grid step."""
    b = int(max(1, min(NC, target_block_bytes // max(plane_bytes, 1))))
    if NC >= 2:
        b = min(b, max(1, NC // 2))
    if NC >= 4 and (NC // 4) * plane_bytes >= (1 << 20):
        b = min(b, NC // 4)
    while NC % b:
        b -= 1
    return b


def gaussian_smoothing(x, kernel_size, sigma, *,
                       target_block_bytes=4 << 20,
                       vmem_limit_bytes=48 << 20):
    """x: (N, C, H, W). Returns (N, C, H-K0+1, W-K1+1) — depthwise Gaussian 'valid'
    convolution, matching F.conv2d(input, weight, groups=C) of the module."""
    N, C, H, W = x.shape
    g0, g1 = make_separable_gaussian(kernel_size, sigma)
    K0, K1 = len(g0), len(g1)
    assert H >= K0 and W >= K1, "spatial dims must be >= kernel_size (valid conv)"
    H_out, W_out = H - K0 + 1, W - K1 + 1

    NC = N * C
    x_flat = x.reshape(NC, H, W)                      # free reshape, no HBM relayout

    plane_bytes = H * W * x.dtype.itemsize
    # TODO(synk): add halo'd H-tiling for single planes larger than the block budget
    # (H*W*itemsize > target_block_bytes); not needed for VGG-scale images.
    B = _choose_nc_block(NC, plane_bytes, target_block_bytes)

    kernel_fn = functools.partial(_smooth_kernel, g0=g0, g1=g1,
                                  H_out=H_out, W_out=W_out)

    out_flat = pl.pallas_call(
        kernel_fn,
        out_shape=jax.ShapeDtypeStruct((NC, H_out, W_out), x.dtype),
        grid_spec=pltpu.PrefetchScalarGridSpec(
            num_scalar_prefetch=0,
            grid=(NC // B,),
            in_specs=[pl.BlockSpec((B, H, W), lambda n: (n, 0, 0))],
            out_specs=pl.BlockSpec((B, H_out, W_out), lambda n: (n, 0, 0)),
        ),
        compiler_params=pltpu.CompilerParams(
            dimension_semantics=("parallel",),
            vmem_limit_bytes=vmem_limit_bytes),
    )(x_flat)

    return out_flat.reshape(N, C, H_out, W_out)       # free reshape


# --------------------------------------------------------------------------- reference

def _reference(x, kernel_size, sigma):
    """Pure-JAX reference: depthwise valid conv, matching F.conv2d(groups=C)."""
    N, C, H, W = x.shape
    gk = jnp.asarray(make_gaussian_kernel_2d(kernel_size, sigma))
    K0, K1 = gk.shape
    w = jnp.broadcast_to(gk[None, None, :, :], (C, 1, K0, K1))
    return lax.conv_general_dilated(
        x, w, window_strides=(1, 1), padding="VALID",
        dimension_numbers=("NCHW", "OIHW", "NCHW"),
        feature_group_count=C)


if __name__ == "__main__":
    key = jax.random.PRNGKey(0)

    # Small shape consistent with the module.
    N, C, H, W = 2, 4, 16, 16
    kernel_size, sigma = 3, 1.0
    x = jax.random.normal(key, (N, C, H, W), dtype=jnp.float32)

    out = jax.block_until_ready(gaussian_smoothing(x, kernel_size, sigma))
    ref = jax.block_until_ready(_reference(x, kernel_size, sigma))
    assert out.shape == ref.shape, (out.shape, ref.shape)
    np.testing.assert_allclose(np.asarray(out), np.asarray(ref),
                               rtol=1e-5, atol=1e-5)

    # Larger channel count (multi-step parallel grid over N*C).
    N2, C2 = 2, 64
    x2 = jax.random.normal(jax.random.PRNGKey(1), (N2, C2, H, W), dtype=jnp.float32)
    out2 = jax.block_until_ready(gaussian_smoothing(x2, kernel_size, sigma))
    ref2 = jax.block_until_ready(_reference(x2, kernel_size, sigma))
    np.testing.assert_allclose(np.asarray(out2), np.asarray(ref2),
                               rtol=1e-5, atol=1e-5)

    # Asymmetric kernel / sigma and non-square spatial dims.
    x3 = jax.random.normal(jax.random.PRNGKey(2), (1, 8, 24, 32), dtype=jnp.float32)
    ks3, sg3 = (3, 5), (1.0, 2.0)
    out3 = jax.block_until_ready(gaussian_smoothing(x3, ks3, sg3))
    ref3 = jax.block_until_ready(_reference(x3, ks3, sg3))
    assert out3.shape == ref3.shape, (out3.shape, ref3.shape)
    np.testing.assert_allclose(np.asarray(out3), np.asarray(ref3),
                               rtol=1e-5, atol=1e-5)

    print("KERNEL_OK")
</pallas_src>

<mosaic_0001>
module attributes {stable_mosaic.version = 11 : i64} {
  func.func @_smooth_kernel(%arg0: i32, %arg1: memref<4x16x16xf32, #tpu.memory_space<vmem>>, %arg2: memref<4x14x14xf32, #tpu.memory_space<vmem>>) attributes {dimension_semantics = [#tpu.dimension_semantics<parallel>], iteration_bounds = array<i64: 2>, scalar_prefetch = 0 : i64, scratch_operands = 0 : i64, tpu.core_type = #tpu.core_type<tc>, window_params = [{transform_indices = @transform_0, window_bounds = array<i64: 4, 16, 16>}, {transform_indices = @transform_1, window_bounds = array<i64: 4, 14, 14>}]} {
    %c0 = arith.constant 0 : index
    %c0_0 = arith.constant 0 : index
    %c0_1 = arith.constant 0 : index
    %0 = vector.load %arg1[%c0, %c0_0, %c0_1] : memref<4x16x16xf32, #tpu.memory_space<vmem>>, vector<4x14x16xf32>
    %cst = arith.constant 0.274068624 : f32
    %1 = vector.broadcast %cst : f32 to vector<4x14x16xf32>
    %2 = arith.mulf %1, %0 : vector<4x14x16xf32>
    %c0_2 = arith.constant 0 : index
    %c1 = arith.constant 1 : index
    %c0_3 = arith.constant 0 : index
    %3 = vector.load %arg1[%c0_2, %c1, %c0_3] : memref<4x16x16xf32, #tpu.memory_space<vmem>>, vector<4x14x16xf32>
    %cst_4 = arith.constant 0.451862752 : f32
    %4 = vector.broadcast %cst_4 : f32 to vector<4x14x16xf32>
    %5 = arith.mulf %4, %3 : vector<4x14x16xf32>
    %6 = arith.addf %2, %5 : vector<4x14x16xf32>
    %c0_5 = arith.constant 0 : index
    %c2 = arith.constant 2 : index
    %c0_6 = arith.constant 0 : index
    %7 = vector.load %arg1[%c0_5, %c2, %c0_6] : memref<4x16x16xf32, #tpu.memory_space<vmem>>, vector<4x14x16xf32>
    %cst_7 = arith.constant 0.274068624 : f32
    %8 = vector.broadcast %cst_7 : f32 to vector<4x14x16xf32>
    %9 = arith.mulf %8, %7 : vector<4x14x16xf32>
    %10 = arith.addf %6, %9 : vector<4x14x16xf32>
    %11 = vector.extract_strided_slice %10 {offsets = [0, 0, 0], sizes = [4, 14, 14], strides = [1, 1, 1]} : vector<4x14x16xf32> to vector<4x14x14xf32>
    %cst_8 = arith.constant 0.274068624 : f32
    %12 = vector.broadcast %cst_8 : f32 to vector<4x14x14xf32>
    %13 = arith.mulf %12, %11 : vector<4x14x14xf32>
    %14 = vector.extract_strided_slice %10 {offsets = [0, 0, 1], sizes = [4, 14, 14], strides = [1, 1, 1]} : vector<4x14x16xf32> to vector<4x14x14xf32>
    %cst_9 = arith.constant 0.451862752 : f32
    %15 = vector.broadcast %cst_9 : f32 to vector<4x14x14xf32>
    %16 = arith.mulf %15, %14 : vector<4x14x14xf32>
    %17 = arith.addf %13, %16 : vector<4x14x14xf32>
    %18 = vector.extract_strided_slice %10 {offsets = [0, 0, 2], sizes = [4, 14, 14], strides = [1, 1, 1]} : vector<4x14x16xf32> to vector<4x14x14xf32>
    %cst_10 = arith.constant 0.274068624 : f32
    %19 = vector.broadcast %cst_10 : f32 to vector<4x14x14xf32>
    %20 = arith.mulf %19, %18 : vector<4x14x14xf32>
    %21 = arith.addf %17, %20 : vector<4x14x14xf32>
    %c0_11 = arith.constant 0 : index
    %c0_12 = arith.constant 0 : index
    %c0_13 = arith.constant 0 : index
    %22 = vector.load %arg2[%c0_11, %c0_12, %c0_13] : memref<4x14x14xf32, #tpu.memory_space<vmem>>, vector<4x14x14xf32>
    tpu.vector_store %arg2[%c0_11, %c0_12, %c0_13], %21 {strides = array<i32>} : memref<4x14x14xf32, #tpu.memory_space<vmem>>, vector<4x14x14xf32>,
    return
  }
  func.func @transform_0(%arg0: i32) -> (i32, i32, i32) {
    %c0_i32 = arith.constant 0 : i32
    %c0_i32_0 = arith.constant 0 : i32
    %c0_i32_1 = arith.constant 0 : i32
    return %arg0, %c0_i32, %c0_i32_0 : i32, i32, i32
  }
  func.func @transform_1(%arg0: i32) -> (i32, i32, i32) {
    %c0_i32 = arith.constant 0 : i32
    %c0_i32_0 = arith.constant 0 : i32
    %c0_i32_1 = arith.constant 0 : i32
    return %arg0, %c0_i32, %c0_i32_0 : i32, i32, i32
  }
}

</mosaic_0001>

<llo_original>
// kernel: tpu_custom_call.1
$region0: #{tpu_custom_call.1}
  #allocation0 [shape = 'u32[]', space=smem, size = 0x4, offset = 0x4, fixed_abs, tag = 'smem constant byte address 0x4 - core index']
  #allocation1 [shape = 'u32[72,128]{1,0:T(1,128)}', space=vmem, size = 0x9000, scoped, tag = 'internal scratch']
  %s0 = inlined_call_operand.hbm [shape: f32[8,16,16], index: 0, kind: input, shape index: {}]
  %s1 = inlined_call_operand.vmem [shape: f32[8,14,14], index: 1, kind: output, shape index: {}]
  %s2 = sld [smem:[#allocation0]]
  $region41: #{tpu_custom_call.1} parent=0
    _
  %s4 = ssub.s32 1, %s2
  %s5 = scalar_select 0, %s4, %s2
  $region1: #{tpu_custom_call.1} parent=0
    #allocation2 [shape = 'u8[65536]{0}', space=vmem, size = 0x10000, scoped, tag = 'input window, operand 0']
    #allocation3 [shape = 's32[2]{0}', space=sflag, size = 0x8, scoped, tag = 'scoped memory for tpu_custom_call.1']
    %6 = vsyncpa [#allocation3], 0
    %s7 = scalar_lea.sflag [#allocation3], 1
    %8 = vsyncpa %s7, 0
    loop: start=0, step=1, limit=4
    $region2: #{tpu_custom_call.1} parent=1 // loop_pre_header
      _
    $region3: #{tpu_custom_call.1} parent=1 // loop_header
      %s10 = sphi 0, %s14
      %p11 = scmp.ge.s32.totalorder %s10, 4
      %s20 = sphi 0, %s22
      %s23 = sphi 0, %s20
      %s24 = sphi 0, %s23
      %s40 = sphi 0, %s24
      %s46 = sphi 0, %s48
      %s49 = sphi 0, %s46
      %s50 = sphi 0, %s49
      %s66 = sphi 0, %s50
    $region4: #{tpu_custom_call.1} parent=1 // loop_header_branch
      %13 = sbr.rel (%p11) target = $region8
    $region5: #{tpu_custom_call.1} parent=1 // loop_body
      %s15 = ssub.s32 %s10, 1
      %s16 = ssub.s32 %s10, 2
      %s17 = sadd.s32 %s10, 1
      %s18 = ssub.s32 %s10, %s17
      %p19 = scmp.eq.s32.totalorder %s18, 0
      %s21 = sadd.s32 %s20, 1
      %s22 = scalar_select %p19, %s20, %s21
      %p25 = pneg %p19
      %p26 = scmp.eq.s32.totalorder %s10, 1
      %p27 = por %p25, %p26
      %p28 = scmp.ne.s32.totalorder %s20, %s23
      %p29 = scmp.eq.s32.totalorder %s10, 0
      %p30 = por %p28, %p29
      %p31 = scmp.ne.s32.totalorder %s20, %s23
      %p32 = scmp.eq.s32.totalorder %s15, 1
      %p33 = por %p31, %p32
      %p34 = scmp.ne.s32.totalorder %s23, %s24
      %p35 = scmp.eq.s32.totalorder %s15, 0
      %p36 = por %p34, %p35
      %p37 = scmp.ne.s32.totalorder %s23, %s24
      %p38 = scmp.eq.s32.totalorder %s16, 1
      %p39 = por %p37, %p38
      %p41 = scmp.ne.s32.totalorder %s24, %s40
      %p42 = scmp.eq.s32.totalorder %s16, 0
      %p43 = por %p41, %p42
      %s44 = ssub.s32 %s10, %s17
      %p45 = scmp.eq.s32.totalorder %s44, 0
      %s47 = sadd.s32 %s46, 1
      %s48 = scalar_select %p45, %s46, %s47
      %p51 = pneg %p45
      %p52 = scmp.eq.s32.totalorder %s10, 1
      %p53 = por %p51, %p52
      %p54 = scmp.ne.s32.totalorder %s46, %s49
      %p55 = scmp.eq.s32.totalorder %s10, 0
      %p56 = por %p54, %p55
      %p57 = scmp.ne.s32.totalorder %s46, %s49
      %p58 = scmp.eq.s32.totalorder %s15, 1
      %p59 = por %p57, %p58
      %p60 = scmp.ne.s32.totalorder %s49, %s50
      %p61 = scmp.eq.s32.totalorder %s15, 0
      %p62 = por %p60, %p61
      %p63 = scmp.ne.s32.totalorder %s49, %s50
      %p64 = scmp.eq.s32.totalorder %s16, 1
      %p65 = por %p63, %p64
      %p67 = scmp.ne.s32.totalorder %s50, %s66
      %p68 = scmp.eq.s32.totalorder %s16, 0
      %p69 = por %p67, %p68
      %p70 = scmp.le.s32.totalorder 1, %s10
      %p71 = scmp.lt.s32.totalorder %s10, 3
      %p72 = pnand %p70, %p71
      %p73 = pneg %p72
      // Predicated region
      $region9: #{tpu_custom_call.1} parent=5 // pred_check
        _
      $region10: #{tpu_custom_call.1} parent=5 // pred_check_branch
        %75 = sbr.rel (%p72) target = $region12
      $region11: #{tpu_custom_call.1} parent=5 // pred_region
        %s76 = ssub.s32 %s10, 1
      $region12: #{tpu_custom_call.1} parent=5 // pred_fallthru
        _
      %p77 = scmp.lt.s32.totalorder %s10, 2
      // Predicated region
      $region13: #{tpu_custom_call.1} parent=5 // pred_check
        %p78 = pneg %p77
      $region14: #{tpu_custom_call.1} parent=5 // pred_check_branch
        %80 = sbr.rel (%p78) target = $region16
      $region15: #{tpu_custom_call.1} parent=5 // pred_region
        // Predicated region
        $region17: #{tpu_custom_call.1} parent=15 // pred_check
          %p81 = pneg %p30
        $region18: #{tpu_custom_call.1} parent=15 // pred_check_branch
          %83 = sbr.rel (%p81) target = $region20
        $region19: #{tpu_custom_call.1} parent=15 // pred_region
          %s84 = sand.u32 %s20, 1
          %s85 = scalar_lea.sflag [#allocation3], %s84
          %s86 = sand.u32 %s20, 1
          %s87 = smul.addr %s86, 64
          %s88 = scalar_lea.vmem [#allocation2], %s87
          %s89 = smul.u32 4, %s10
          %91 = vsyncadd %s85, 0
          %s92 = smul.addr %s89, 2
          %s93 = smul.addr %s92, 8
          %s94 = scalar_lea.hbm %s0, %s93
          %s95 = sshll.u32 %s94, 4
          %s96 = int_to_ptr.hbm [resolvable:$true] %s95
          %s97 = sshll.u32 %s88, 4
          %s98 = int_to_ptr.vmem [resolvable:$true] %s97
          %103 = dma.hbm_to_vmem [thread:$0]  %s96, 1024, %s98, %s85, 128, 128, 8
        $region20: #{tpu_custom_call.1} parent=15 // pred_fallthru
          _
      $region16: #{tpu_custom_call.1} parent=5 // pred_fallthru
        _
      %p104 = scmp.le.s32.totalorder 1, %s10
      %p105 = scmp.lt.s32.totalorder %s10, 3
      %p106 = pnand %p104, %p105
      %p107 = pneg %p106
      // Predicated region
      $region21: #{tpu_custom_call.1} parent=5 // pred_check
        _
      $region22: #{tpu_custom_call.1} parent=5 // pred_check_branch
        %109 = sbr.rel (%p106) target = $region24
      $region23: #{tpu_custom_call.1} parent=5 // pred_region
        %s110 = ssub.s32 %s10, 1
        %s111 = sand.u32 %s23, 1
        %s112 = scalar_lea.sflag [#allocation3], %s111
        %s113 = sand.u32 %s23, 1
        %s114 = smul.addr %s113, 64
        %s115 = scalar_lea.vmem [#allocation2], %s114
        // Predicated region
        $region25: #{tpu_custom_call.1} parent=23 // pred_check
          %p116 = pneg %p36
        $region26: #{tpu_custom_call.1} parent=23 // pred_check_branch
          %118 = sbr.rel (%p116) target = $region28
        $region27: #{tpu_custom_call.1} parent=23 // pred_region
          %120 = dma.done %s112, 1024
        $region28: #{tpu_custom_call.1} parent=23 // pred_fallthru
          _
        %s121 = sand.u32 %s23, 1
        %s122 = scalar_lea.sflag [#allocation3], %s121
        %s123 = sand.u32 %s23, 1
        %s124 = smul.addr %s123, 64
        %s125 = scalar_lea.vmem [#allocation2], %s124
        %p126 = pneg %p36
        %p127 = pneg %p33
        %p128 = pneg %p62
        %p129 = pneg %p59
        %s130 = smul.u32 4, %s15
        %p131 = scmp.lt.s32.totalorder %s130, 7
        %s132 = scalar_select %p131, %s130, 7
        %s133 = smul.addr %s132, 2
        %s134 = smul.addr %s133, 8
        %s135 = scalar_lea.vmem %s1, %s134
        %s136 = smul.u32 4, %s15
        %s137 = smul.u32 4, %s15
        %p138 = scmp.lt.s32.totalorder %s137, 7
        %s139 = scalar_select %p138, %s137, 7
        %s140 = smul.addr %s139, 2
        %s141 = smul.addr %s140, 8
        %s142 = scalar_lea.vmem %s1, %s141
        %s143 = smul.u32 4, %s15
        %v144 = vld [vmem:[%s115] sm:$0xff]
        %v145 = vld [vmem:[%s115 + $0x8] sm:$0x3f]
        %v146 = vld [vmem:[%s115 + $0x10] sm:$0xff]
        %v147 = vld [vmem:[%s115 + $0x18] sm:$0x3f]
        %v148 = vld [vmem:[%s115 + $0x20] sm:$0xff]
        %v149 = vld [vmem:[%s115 + $0x28] sm:$0x3f]
        %v150 = vld [vmem:[%s115 + $0x30] sm:$0xff]
        %v151 = vld [vmem:[%s115 + $0x38] sm:$0x3f]
        %v152 = vmul.f32 %v144, 0.27406862
        %v153 = vmul.f32 %v145, 0.27406862
        %v154 = vmul.f32 %v146, 0.27406862
        %v155 = vmul.f32 %v147, 0.27406862
        %v156 = vmul.f32 %v148, 0.27406862
        %v157 = vmul.f32 %v149, 0.27406862
        %v158 = vmul.f32 %v150, 0.27406862
        %v159 = vmul.f32 %v151, 0.27406862
        %v160 = vld [vmem:[%s115 + $0x1] sm:$0xff]
        %v161 = vld [vmem:[%s115 + $0x9] sm:$0x3f]
        %v162 = vld [vmem:[%s115 + $0x11] sm:$0xff]
        %v163 = vld [vmem:[%s115 + $0x19] sm:$0x3f]
        %v164 = vld [vmem:[%s115 + $0x21] sm:$0xff]
        %v165 = vld [vmem:[%s115 + $0x29] sm:$0x3f]
        %v166 = vld [vmem:[%s115 + $0x31] sm:$0xff]
        %v167 = vld [vmem:[%s115 + $0x39] sm:$0x3f]
        %v168 = vmul.f32 %v160, 0.45186275
        %v169 = vmul.f32 %v161, 0.45186275
        %v170 = vmul.f32 %v162, 0.45186275
        %v171 = vmul.f32 %v163, 0.45186275
        %v172 = vmul.f32 %v164, 0.45186275
        %v173 = vmul.f32 %v165, 0.45186275
        %v174 = vmul.f32 %v166, 0.45186275
        %v175 = vmul.f32 %v167, 0.45186275
        %v176 = vadd.f32 %v152, %v168
        %v177 = vadd.f32 %v153, %v169
        %v178 = vadd.f32 %v154, %v170
        %v179 = vadd.f32 %v155, %v171
        %v180 = vadd.f32 %v156, %v172
        %v181 = vadd.f32 %v157, %v173
        %v182 = vadd.f32 %v158, %v174
        %v183 = vadd.f32 %v159, %v175
        %v184 = vld [vmem:[%s115 + $0x2] sm:$0xff]
        %v185 = vld [vmem:[%s115 + $0xa] sm:$0x3f]
        %v186 = vld [vmem:[%s115 + $0x12] sm:$0xff]
        %v187 = vld [vmem:[%s115 + $0x1a] sm:$0x3f]
        %v188 = vld [vmem:[%s115 + $0x22] sm:$0xff]
        %v189 = vld [vmem:[%s115 + $0x2a] sm:$0x3f]
        %v190 = vld [vmem:[%s115 + $0x32] sm:$0xff]
        %v191 = vld [vmem:[%s115 + $0x3a] sm:$0x3f]
        %v192 = vmul.f32 %v184, 0.27406862
        %v193 = vmul.f32 %v185, 0.27406862
        %v194 = vmul.f32 %v186, 0.27406862
        %v195 = vmul.f32 %v187, 0.27406862
        %v196 = vmul.f32 %v188, 0.27406862
        %v197 = vmul.f32 %v189, 0.27406862
        %v198 = vmul.f32 %v190, 0.27406862
        %v199 = vmul.f32 %v191, 0.27406862
        %v200 = vadd.f32 %v176, %v192
        %v201 = vadd.f32 %v177, %v193
        %v202 = vadd.f32 %v178, %v194
        %v203 = vadd.f32 %v179, %v195
        %v204 = vadd.f32 %v180, %v196
        %v205 = vadd.f32 %v181, %v197
        %v206 = vadd.f32 %v182, %v198
        %v207 = vadd.f32 %v183, %v199
        %v208 = vmul.f32 %v200, 0.27406862
        %v209 = vmul.f32 %v201, 0.27406862
        %v210 = vmul.f32 %v202, 0.27406862
        %v211 = vmul.f32 %v203, 0.27406862
        %v212 = vmul.f32 %v204, 0.27406862
        %v213 = vmul.f32 %v205, 0.27406862
        %v214 = vmul.f32 %v206, 0.27406862
        %v215 = vmul.f32 %v207, 0.27406862
        %v216 = vmul.f32 %v200, 0.45186275
        %v217 = vmul.f32 %v201, 0.45186275
        %v218 = vmul.f32 %v202, 0.45186275
        %v219 = vmul.f32 %v203, 0.45186275
        %v220 = vmul.f32 %v204, 0.45186275
        %v221 = vmul.f32 %v205, 0.45186275
        %v222 = vmul.f32 %v206, 0.45186275
        %v223 = vmul.f32 %v207, 0.45186275
        %232 = vrot.lane.b32.xlu0 %v216, 127
        %v233 = vpop.permute.xlu0 %232
        %234 = vrot.lane.b32.xlu0 %v217, 127
        %v235 = vpop.permute.xlu0 %234
        %236 = vrot.lane.b32.xlu0 %v218, 127
        %v237 = vpop.permute.xlu0 %236
        %238 = vrot.lane.b32.xlu0 %v219, 127
        %v239 = vpop.permute.xlu0 %238
        %240 = vrot.lane.b32.xlu0 %v220, 127
        %v241 = vpop.permute.xlu0 %240
        %242 = vrot.lane.b32.xlu0 %v221, 127
        %v243 = vpop.permute.xlu0 %242
        %244 = vrot.lane.b32.xlu0 %v222, 127
        %v245 = vpop.permute.xlu0 %244
        %246 = vrot.lane.b32.xlu0 %v223, 127
        %v247 = vpop.permute.xlu0 %246
        %v256 = vadd.f32 %v208, %v233
        %v257 = vadd.f32 %v209, %v235
        %v258 = vadd.f32 %v210, %v237
        %v259 = vadd.f32 %v211, %v239
        %v260 = vadd.f32 %v212, %v241
        %v261 = vadd.f32 %v213, %v243
        %v262 = vadd.f32 %v214, %v245
        %v263 = vadd.f32 %v215, %v247
        %272 = vrot.lane.b32.xlu0 %v208, 126
        %v273 = vpop.permute.xlu0 %272
        %274 = vrot.lane.b32.xlu0 %v209, 126
        %v275 = vpop.permute.xlu0 %274
        %276 = vrot.lane.b32.xlu0 %v210, 126
        %v277 = vpop.permute.xlu0 %276
        %278 = vrot.lane.b32.xlu0 %v211, 126
        %v279 = vpop.permute.xlu0 %278
        %280 = vrot.lane.b32.xlu0 %v212, 126
        %v281 = vpop.permute.xlu0 %280
        %282 = vrot.lane.b32.xlu0 %v213, 126
        %v283 = vpop.permute.xlu0 %282
        %284 = vrot.lane.b32.xlu0 %v214, 126
        %v285 = vpop.permute.xlu0 %284
        %286 = vrot.lane.b32.xlu0 %v215, 126
        %v287 = vpop.permute.xlu0 %286
        %v296 = vadd.f32 %v256, %v273
        %v297 = vadd.f32 %v257, %v275
        %v298 = vadd.f32 %v258, %v277
        %v299 = vadd.f32 %v259, %v279
        %v300 = vadd.f32 %v260, %v281
        %v301 = vadd.f32 %v261, %v283
        %v302 = vadd.f32 %v262, %v285
        %v303 = vadd.f32 %v263, %v287
        %vm304 = vcmask 113664
        %305 = vst.msk [vmem:[%s142] sm:$0xff] %vm304, %v296
        %vm306 = vcmask 111616
        %307 = vst.msk [vmem:[%s142 + $0x8] sm:$0x3f] %vm306, %v297
        %308 = vst.msk [vmem:[%s142 + $0x10] sm:$0xff] %vm304, %v298
        %309 = vst.msk [vmem:[%s142 + $0x18] sm:$0x3f] %vm306, %v299
        %310 = vst.msk [vmem:[%s142 + $0x20] sm:$0xff] %vm304, %v300
        %311 = vst.msk [vmem:[%s142 + $0x28] sm:$0x3f] %vm306, %v301
        %312 = vst.msk [vmem:[%s142 + $0x30] sm:$0xff] %vm304, %v302
        %313 = vst.msk [vmem:[%s142 + $0x38] sm:$0x3f] %vm306, %v303
        %s314 = smul.u32 4, %s15
        %p315 = scmp.lt.s32.totalorder %s314, 7
        %s316 = scalar_select %p315, %s314, 7
        %s317 = smul.addr %s316, 2
        %s318 = smul.addr %s317, 8
        %s319 = scalar_lea.vmem %s1, %s318
        // Predicated region
        $region29: #{tpu_custom_call.1} parent=23 // pred_check
          %p320 = pneg %p59
        $region30: #{tpu_custom_call.1} parent=23 // pred_check_branch
          %322 = sbr.rel (%p320) target = $region32
        $region31: #{tpu_custom_call.1} parent=23 // pred_region
          %s323 = smul.u32 4, %s15
        $region32: #{tpu_custom_call.1} parent=23 // pred_fallthru
          _
      $region24: #{tpu_custom_call.1} parent=5 // pred_fallthru
        _
      %p324 = scmp.le.s32.totalorder 2, %s10
      // Predicated region
      $region33: #{tpu_custom_call.1} parent=5 // pred_check
        %p325 = pneg %p324
      $region34: #{tpu_custom_call.1} parent=5 // pred_check_branch
        %327 = sbr.rel (%p325) target = $region36
      $region35: #{tpu_custom_call.1} parent=5 // pred_region
        %s328 = ssub.s32 %s10, 2
        // Predicated region
        $region37: #{tpu_custom_call.1} parent=35 // pred_check
          %p329 = pneg %p65
        $region38: #{tpu_custom_call.1} parent=35 // pred_check_branch
          %331 = sbr.rel (%p329) target = $region40
        $region39: #{tpu_custom_call.1} parent=35 // pred_region
          %s332 = smul.u32 4, %s16
          %p333 = scmp.lt.s32.totalorder %s332, 7
          %s334 = scalar_select %p333, %s332, 7
          %s335 = smul.addr %s334, 2
          %s336 = smul.addr %s335, 8
          %s337 = scalar_lea.vmem %s1, %s336
        $region40: #{tpu_custom_call.1} parent=35 // pred_fallthru
          _
      $region36: #{tpu_custom_call.1} parent=5 // pred_fallthru
        _
    $region6: #{tpu_custom_call.1} parent=1 // loop_footer
      %s14 = sadd.s32 1, %s10
    $region7: #{tpu_custom_call.1} parent=1 // loop_footer_branch
      %9 = sbr.rel target = $region3
    $region8: #{tpu_custom_call.1} parent=1 // loop_exit
      _
    %338 = vsyncpa [#allocation3], 1
    %s339 = scalar_lea.sflag [#allocation3], 1
    %340 = vsyncpa %s339, 1

</llo_original>
